<compile_context>
chip_gen: v6e
topology: v6e:2x2x1
jax: 0.10.0
libtpu: 0.0.40
codegen_flags: <defaults>
</compile_context>

<pallas_src>
import jax
import jax.numpy as jnp
from jax.experimental import pallas as pl
from jax.experimental.pallas import tpu as pltpu


def _layernorm_relu(h, gamma, beta, eps=1e-5):
    """PyTorch nn.LayerNorm (biased variance, eps=1e-5) over the FEATURE axis
    (axis 0 in feature-major layout), followed by ReLU.

    sum(h) and sum(h*h) are independent so the two cross-sublane reductions
    pipeline in the XLU; post-(fc + bias) values are O(1) so the E[x^2]-mu^2
    form is numerically fine in f32.
    """
    inv_n = 1.0 / h.shape[0]
    s1 = jnp.sum(h, axis=0, keepdims=True)
    s2 = jnp.sum(h * h, axis=0, keepdims=True)
    mu = s1 * inv_n
    var = s2 * inv_n - mu * mu
    y = (h - mu) * jax.lax.rsqrt(var + eps) * gamma + beta
    return jnp.maximum(y, 0.0)


def actor_kernel(x_ref,
                 w1_ref, b1_ref, g1_ref, be1_ref,
                 w2_ref, b2_ref, g2_ref, be2_ref,
                 wh_ref, bh_ref,
                 o_ref):
    x = x_ref[...]                                   # (D, TB) f32, batch on lanes

    # fc1 -> LayerNorm -> ReLU   (W1 is [fc1, D]; MXU dot, f32 accumulation)
    h = jnp.dot(w1_ref[...], x, preferred_element_type=jnp.float32) + b1_ref[...]
    h = _layernorm_relu(h, g1_ref[...], be1_ref[...])

    # fc2 -> LayerNorm -> ReLU   (W2 is [fc2, fc1])
    h = jnp.dot(w2_ref[...], h, preferred_element_type=jnp.float32) + b2_ref[...]
    h = _layernorm_relu(h, g2_ref[...], be2_ref[...])

    # Fused heads: Wh is [n_heads, fc2]; row 0 -> mu_z (sigmoid), rest -> tanh.
    z = jnp.dot(wh_ref[...], h, preferred_element_type=jnp.float32) + bh_ref[...]

    # Single-transcendental epilogue: sigmoid(x) == 0.5 * (tanh(x / 2) + 1).
    row = jax.lax.broadcasted_iota(jnp.int32, z.shape, dimension=0)
    is_sig = row == 0
    t = jnp.tanh(z * jnp.where(is_sig, 0.5, 1.0))
    o_ref[...] = jnp.where(is_sig, 0.5 * (t + 1.0), t).astype(o_ref.dtype)


def actor_forward(state, params, *, num_batch_tiles=None):
    """state: [B, input_dim] f32 (batch-major, like PyTorch). Returns [B, n_heads].

    Internally runs feature-major: the kernel sees state as (D, B_padded) with
    the batch on the lane axis.
    """
    B, D = state.shape
    fc1 = params["w1"].shape[0]            # weights are [out, in] (PyTorch order)
    fc2 = params["w2"].shape[0]
    n_heads = params["wh"].shape[0]

    if num_batch_tiles is None:
        # One tile per TensorCore: 1 on v5e/v6e; 2 on v7x if the attr exists.
        try:
            num_batch_tiles = max(1, int(getattr(jax.devices()[0], "num_cores", 1)))
        except Exception:
            num_batch_tiles = 1

    # Lane-dense batch tiles: each tile is a multiple of 128 lanes.
    n_blocks = pl.cdiv(B, 128)
    num_tiles = max(1, min(num_batch_tiles, n_blocks))
    tb = 128 * pl.cdiv(n_blocks, num_tiles)
    bp = tb * num_tiles

    # Zero-padded batch columns are independent under feature-axis LayerNorm
    # (finite, no NaN) and are sliced off below.
    state_t = jnp.pad(state, ((0, bp - B), (0, 0))).T          # (D, bp)

    batch_map = lambda i: (0, i)     # tiles over the lane (batch) axis
    const_map = lambda i: (0, 0)     # params stay VMEM-resident across the grid

    out_t = pl.pallas_call(
        actor_kernel,
        out_shape=jax.ShapeDtypeStruct((n_heads, bp), jnp.float32),
        grid=(num_tiles,),
        in_specs=[
            pl.BlockSpec((D, tb), batch_map),            # state (feature-major)
            pl.BlockSpec((fc1, D), const_map),           # w1  [out, in]
            pl.BlockSpec((fc1, 1), const_map),           # b1
            pl.BlockSpec((fc1, 1), const_map),           # gamma1
            pl.BlockSpec((fc1, 1), const_map),           # beta1
            pl.BlockSpec((fc2, fc1), const_map),         # w2  [out, in]
            pl.BlockSpec((fc2, 1), const_map),           # b2
            pl.BlockSpec((fc2, 1), const_map),           # gamma2
            pl.BlockSpec((fc2, 1), const_map),           # beta2
            pl.BlockSpec((n_heads, fc2), const_map),     # wh (fused heads)
            pl.BlockSpec((n_heads, 1), const_map),       # bh
        ],
        out_specs=pl.BlockSpec((n_heads, tb), batch_map),
        compiler_params=pltpu.CompilerParams(
            dimension_semantics=(pltpu.PARALLEL,)),      # batch axis shardable over TCs
    )(state_t,
      params["w1"], params["b1"], params["g1"], params["be1"],
      params["w2"], params["b2"], params["g2"], params["be2"],
      params["wh"], params["bh"])

    return out_t[:, :B].T                                # back to [B, n_heads]


def init_params(key, input_dim, fc1_dims, fc2_dims, allow_x_movement=True):
    """Matches PyTorch __init__: f1 = 1/sqrt(fc1.weight.size(0)) = 1/sqrt(fc1_dims),
    f2 = 1/sqrt(fc2_dims), f3 = 0.003.  LayerNorm gamma=1, beta=0.
    Weights kept in PyTorch [out_features, in_features] order; biases/LN params
    stored as [out, 1] columns (feature-major)."""
    ks = jax.random.split(key, 6)
    f1 = float(fc1_dims) ** -0.5
    f2 = float(fc2_dims) ** -0.5
    f3 = 0.003
    n_heads = 3 if allow_x_movement else 2

    def u(k, shape, bound):
        return jax.random.uniform(k, shape, jnp.float32, -bound, bound)

    return {
        "w1": u(ks[0], (fc1_dims, input_dim), f1),
        "b1": u(ks[1], (fc1_dims, 1), f1),
        "g1": jnp.ones((fc1_dims, 1), jnp.float32),
        "be1": jnp.zeros((fc1_dims, 1), jnp.float32),
        "w2": u(ks[2], (fc2_dims, fc1_dims), f2),
        "b2": u(ks[3], (fc2_dims, 1), f2),
        "g2": jnp.ones((fc2_dims, 1), jnp.float32),
        "be2": jnp.zeros((fc2_dims, 1), jnp.float32),
        # fused heads: rows = [mu_z | mu_x | mu_a] (or [mu_z | mu_a])
        "wh": u(ks[4], (n_heads, fc2_dims), f3),
        "bh": u(ks[5], (n_heads, 1), f3),
    }


def reference_forward(state, params):
    """Pure-JAX reference matching the PyTorch forward."""
    def ln(x, g, b):
        mu = jnp.mean(x, axis=-1, keepdims=True)
        var = jnp.mean((x - mu) ** 2, axis=-1, keepdims=True)
        return (x - mu) / jnp.sqrt(var + 1e-5) * g + b

    h = state @ params["w1"].T + params["b1"].T
    h = jnp.maximum(ln(h, params["g1"].T, params["be1"].T), 0.0)
    h = h @ params["w2"].T + params["b2"].T
    h = jnp.maximum(ln(h, params["g2"].T, params["be2"].T), 0.0)
    z = h @ params["wh"].T + params["bh"].T
    return jnp.concatenate([jax.nn.sigmoid(z[:, :1]), jnp.tanh(z[:, 1:])], axis=-1)


if __name__ == "__main__":
    key = jax.random.PRNGKey(0)
    k_param, k_param2, k_state, k_big = jax.random.split(key, 4)

    INPUT_DIM, FC1, FC2 = 16, 64, 64

    # --- allow_x_movement=True (3 heads), small batch, single grid step -------
    params = init_params(k_param, INPUT_DIM, FC1, FC2, allow_x_movement=True)
    B = 8
    state = jax.random.normal(k_state, (B, INPUT_DIM), jnp.float32)
    out = jax.block_until_ready(actor_forward(state, params))
    ref = reference_forward(state, params)
    assert out.shape == (B, 3), out.shape
    assert jnp.allclose(out, ref, atol=1e-4, rtol=1e-4)

    # --- larger batch, 2 batch tiles (one per TC on v7x; harmless elsewhere) --
    B_big = 512
    state_big = jax.random.normal(k_big, (B_big, INPUT_DIM), jnp.float32)
    out_big = jax.block_until_ready(
        actor_forward(state_big, params, num_batch_tiles=2))
    ref_big = reference_forward(state_big, params)
    assert out_big.shape == (B_big, 3), out_big.shape
    assert jnp.allclose(out_big, ref_big, atol=1e-4, rtol=1e-4)

    # --- allow_x_movement=False (2 heads: [sigmoid(mu_z), tanh(mu_a)]) --------
    params2 = init_params(k_param2, INPUT_DIM, FC1, FC2, allow_x_movement=False)
    out2 = jax.block_until_ready(actor_forward(state, params2))
    ref2 = reference_forward(state, params2)
    assert out2.shape == (B, 2), out2.shape
    assert jnp.allclose(out2, ref2, atol=1e-4, rtol=1e-4)

    print("KERNEL_OK")
</pallas_src>

<mosaic_0001>
module attributes {stable_mosaic.version = 11 : i64} {
  func.func @actor_kernel(%arg0: i32, %arg1: memref<16x128xf32, #tpu.memory_space<vmem>>, %arg2: memref<64x16xf32, #tpu.memory_space<vmem>>, %arg3: memref<64x1xf32, #tpu.memory_space<vmem>>, %arg4: memref<64x1xf32, #tpu.memory_space<vmem>>, %arg5: memref<64x1xf32, #tpu.memory_space<vmem>>, %arg6: memref<64x64xf32, #tpu.memory_space<vmem>>, %arg7: memref<64x1xf32, #tpu.memory_space<vmem>>, %arg8: memref<64x1xf32, #tpu.memory_space<vmem>>, %arg9: memref<64x1xf32, #tpu.memory_space<vmem>>, %arg10: memref<3x64xf32, #tpu.memory_space<vmem>>, %arg11: memref<3x1xf32, #tpu.memory_space<vmem>>, %arg12: memref<3x128xf32, #tpu.memory_space<vmem>>) attributes {dimension_semantics = [#tpu.dimension_semantics<parallel>], iteration_bounds = array<i64: 1>, scalar_prefetch = 0 : i64, scratch_operands = 0 : i64, tpu.core_type = #tpu.core_type<tc>, window_params = [{transform_indices = @transform_0, window_bounds = array<i64: 16, 128>}, {pipeline_mode = #tpu.pipeline_mode<synchronous>, transform_indices = @transform_1, window_bounds = array<i64: 64, 16>}, {pipeline_mode = #tpu.pipeline_mode<synchronous>, transform_indices = @transform_2, window_bounds = array<i64: 64, 1>}, {pipeline_mode = #tpu.pipeline_mode<synchronous>, transform_indices = @transform_3, window_bounds = array<i64: 64, 1>}, {pipeline_mode = #tpu.pipeline_mode<synchronous>, transform_indices = @transform_4, window_bounds = array<i64: 64, 1>}, {pipeline_mode = #tpu.pipeline_mode<synchronous>, transform_indices = @transform_5, window_bounds = array<i64: 64, 64>}, {pipeline_mode = #tpu.pipeline_mode<synchronous>, transform_indices = @transform_6, window_bounds = array<i64: 64, 1>}, {pipeline_mode = #tpu.pipeline_mode<synchronous>, transform_indices = @transform_7, window_bounds = array<i64: 64, 1>}, {pipeline_mode = #tpu.pipeline_mode<synchronous>, transform_indices = @transform_8, window_bounds = array<i64: 64, 1>}, {pipeline_mode = #tpu.pipeline_mode<synchronous>, transform_indices = @transform_9, window_bounds = array<i64: 3, 64>}, {pipeline_mode = #tpu.pipeline_mode<synchronous>, transform_indices = @transform_10, window_bounds = array<i64: 3, 1>}, {transform_indices = @transform_11, window_bounds = array<i64: 3, 128>}]} {
    %c0 = arith.constant 0 : index
    %c0_0 = arith.constant 0 : index
    %0 = vector.load %arg1[%c0, %c0_0] : memref<16x128xf32, #tpu.memory_space<vmem>>, vector<16x128xf32>
    %c0_1 = arith.constant 0 : index
    %c0_2 = arith.constant 0 : index
    %1 = vector.load %arg2[%c0_1, %c0_2] : memref<64x16xf32, #tpu.memory_space<vmem>>, vector<64x16xf32>
    %cst = arith.constant dense<0.000000e+00> : vector<64x128xf32>
    %2 = tpu.matmul %1, %0, %cst {dimension_numbers = #tpu.dot_dimension_numbers<[1], [0], [0], [1], [0, 0, 1, 1], [], []>} : vector<64x16xf32>, vector<16x128xf32>, vector<64x128xf32> -> vector<64x128xf32>
    %c0_3 = arith.constant 0 : index
    %c0_4 = arith.constant 0 : index
    %3 = vector.load %arg3[%c0_3, %c0_4] : memref<64x1xf32, #tpu.memory_space<vmem>>, vector<64x1xf32>
    %4 = vector.broadcast %3 : vector<64x1xf32> to vector<64x128xf32>
    %5 = arith.addf %2, %4 : vector<64x128xf32>
    %c0_5 = arith.constant 0 : index
    %c0_6 = arith.constant 0 : index
    %6 = vector.load %arg4[%c0_5, %c0_6] : memref<64x1xf32, #tpu.memory_space<vmem>>, vector<64x1xf32>
    %c0_7 = arith.constant 0 : index
    %c0_8 = arith.constant 0 : index
    %7 = vector.load %arg5[%c0_7, %c0_8] : memref<64x1xf32, #tpu.memory_space<vmem>>, vector<64x1xf32>
    %cst_9 = arith.constant dense<0.000000e+00> : vector<128xf32>
    %8 = vector.multi_reduction <add>, %5, %cst_9 [0] : vector<64x128xf32> to vector<128xf32>
    %9 = vector.shape_cast %8 : vector<128xf32> to vector<1x128xf32>
    %10 = arith.mulf %5, %5 : vector<64x128xf32>
    %cst_10 = arith.constant dense<0.000000e+00> : vector<128xf32>
    %11 = vector.multi_reduction <add>, %10, %cst_10 [0] : vector<64x128xf32> to vector<128xf32>
    %12 = vector.shape_cast %11 : vector<128xf32> to vector<1x128xf32>
    %cst_11 = arith.constant 1.562500e-02 : f32
    %13 = vector.broadcast %cst_11 : f32 to vector<1x128xf32>
    %14 = arith.mulf %9, %13 : vector<1x128xf32>
    %cst_12 = arith.constant 1.562500e-02 : f32
    %15 = vector.broadcast %cst_12 : f32 to vector<1x128xf32>
    %16 = arith.mulf %12, %15 : vector<1x128xf32>
    %17 = arith.mulf %14, %14 : vector<1x128xf32>
    %18 = arith.subf %16, %17 : vector<1x128xf32>
    %19 = vector.broadcast %14 : vector<1x128xf32> to vector<64x128xf32>
    %20 = arith.subf %5, %19 : vector<64x128xf32>
    %cst_13 = arith.constant 9.99999974E-6 : f32
    %21 = vector.broadcast %cst_13 : f32 to vector<1x128xf32>
    %22 = arith.addf %18, %21 : vector<1x128xf32>
    %23 = math.rsqrt %22 : vector<1x128xf32>
    %24 = vector.broadcast %23 : vector<1x128xf32> to vector<64x128xf32>
    %25 = arith.mulf %20, %24 : vector<64x128xf32>
    %26 = vector.broadcast %6 : vector<64x1xf32> to vector<64x128xf32>
    %27 = arith.mulf %25, %26 : vector<64x128xf32>
    %28 = vector.broadcast %7 : vector<64x1xf32> to vector<64x128xf32>
    %29 = arith.addf %27, %28 : vector<64x128xf32>
    %cst_14 = arith.constant 0.000000e+00 : f32
    %30 = vector.broadcast %cst_14 : f32 to vector<64x128xf32>
    %31 = arith.maximumf %29, %30 : vector<64x128xf32>
    %c0_15 = arith.constant 0 : index
    %c0_16 = arith.constant 0 : index
    %32 = vector.load %arg6[%c0_15, %c0_16] : memref<64x64xf32, #tpu.memory_space<vmem>>, vector<64x64xf32>
    %cst_17 = arith.constant dense<0.000000e+00> : vector<64x128xf32>
    %33 = tpu.matmul %32, %31, %cst_17 {dimension_numbers = #tpu.dot_dimension_numbers<[1], [0], [0], [1], [0, 0, 1, 1], [], []>} : vector<64x64xf32>, vector<64x128xf32>, vector<64x128xf32> -> vector<64x128xf32>
    %c0_18 = arith.constant 0 : index
    %c0_19 = arith.constant 0 : index
    %34 = vector.load %arg7[%c0_18, %c0_19] : memref<64x1xf32, #tpu.memory_space<vmem>>, vector<64x1xf32>
    %35 = vector.broadcast %34 : vector<64x1xf32> to vector<64x128xf32>
    %36 = arith.addf %33, %35 : vector<64x128xf32>
    %c0_20 = arith.constant 0 : index
    %c0_21 = arith.constant 0 : index
    %37 = vector.load %arg8[%c0_20, %c0_21] : memref<64x1xf32, #tpu.memory_space<vmem>>, vector<64x1xf32>
    %c0_22 = arith.constant 0 : index
    %c0_23 = arith.constant 0 : index
    %38 = vector.load %arg9[%c0_22, %c0_23] : memref<64x1xf32, #tpu.memory_space<vmem>>, vector<64x1xf32>
    %cst_24 = arith.constant dense<0.000000e+00> : vector<128xf32>
    %39 = vector.multi_reduction <add>, %36, %cst_24 [0] : vector<64x128xf32> to vector<128xf32>
    %40 = vector.shape_cast %39 : vector<128xf32> to vector<1x128xf32>
    %41 = arith.mulf %36, %36 : vector<64x128xf32>
    %cst_25 = arith.constant dense<0.000000e+00> : vector<128xf32>
    %42 = vector.multi_reduction <add>, %41, %cst_25 [0] : vector<64x128xf32> to vector<128xf32>
    %43 = vector.shape_cast %42 : vector<128xf32> to vector<1x128xf32>
    %cst_26 = arith.constant 1.562500e-02 : f32
    %44 = vector.broadcast %cst_26 : f32 to vector<1x128xf32>
    %45 = arith.mulf %40, %44 : vector<1x128xf32>
    %cst_27 = arith.constant 1.562500e-02 : f32
    %46 = vector.broadcast %cst_27 : f32 to vector<1x128xf32>
    %47 = arith.mulf %43, %46 : vector<1x128xf32>
    %48 = arith.mulf %45, %45 : vector<1x128xf32>
    %49 = arith.subf %47, %48 : vector<1x128xf32>
    %50 = vector.broadcast %45 : vector<1x128xf32> to vector<64x128xf32>
    %51 = arith.subf %36, %50 : vector<64x128xf32>
    %cst_28 = arith.constant 9.99999974E-6 : f32
    %52 = vector.broadcast %cst_28 : f32 to vector<1x128xf32>
    %53 = arith.addf %49, %52 : vector<1x128xf32>
    %54 = math.rsqrt %53 : vector<1x128xf32>
    %55 = vector.broadcast %54 : vector<1x128xf32> to vector<64x128xf32>
    %56 = arith.mulf %51, %55 : vector<64x128xf32>
    %57 = vector.broadcast %37 : vector<64x1xf32> to vector<64x128xf32>
    %58 = arith.mulf %56, %57 : vector<64x128xf32>
    %59 = vector.broadcast %38 : vector<64x1xf32> to vector<64x128xf32>
    %60 = arith.addf %58, %59 : vector<64x128xf32>
    %cst_29 = arith.constant 0.000000e+00 : f32
    %61 = vector.broadcast %cst_29 : f32 to vector<64x128xf32>
    %62 = arith.maximumf %60, %61 : vector<64x128xf32>
    %c0_30 = arith.constant 0 : index
    %c0_31 = arith.constant 0 : index
    %63 = vector.load %arg10[%c0_30, %c0_31] : memref<3x64xf32, #tpu.memory_space<vmem>>, vector<3x64xf32>
    %cst_32 = arith.constant dense<0.000000e+00> : vector<3x128xf32>
    %64 = tpu.matmul %63, %62, %cst_32 {dimension_numbers = #tpu.dot_dimension_numbers<[1], [0], [0], [1], [0, 0, 1, 1], [], []>} : vector<3x64xf32>, vector<64x128xf32>, vector<3x128xf32> -> vector<3x128xf32>
    %c0_33 = arith.constant 0 : index
    %c0_34 = arith.constant 0 : index
    %65 = vector.load %arg11[%c0_33, %c0_34] : memref<3x1xf32, #tpu.memory_space<vmem>>, vector<3x1xf32>
    %66 = vector.broadcast %65 : vector<3x1xf32> to vector<3x128xf32>
    %67 = arith.addf %64, %66 : vector<3x128xf32>
    %68 = tpu.iota {dimensions = array<i32: 0>} : vector<3x128xi32>
    %c0_i32 = arith.constant 0 : i32
    %69 = vector.broadcast %c0_i32 : i32 to vector<3x128xi32>
    %70 = arith.cmpi eq, %68, %69 : vector<3x128xi32>
    %cst_35 = arith.constant 5.000000e-01 : f32
    %cst_36 = arith.constant 1.000000e+00 : f32
    %71 = vector.broadcast %cst_35 : f32 to vector<3x128xf32>
    %72 = vector.broadcast %cst_36 : f32 to vector<3x128xf32>
    %73 = arith.select %70, %71, %72 : vector<3x128xi1>, vector<3x128xf32>
    %74 = arith.mulf %67, %73 : vector<3x128xf32>
    %75 = math.tanh %74 : vector<3x128xf32>
    %cst_37 = arith.constant 1.000000e+00 : f32
    %76 = vector.broadcast %cst_37 : f32 to vector<3x128xf32>
    %77 = arith.addf %75, %76 : vector<3x128xf32>
    %cst_38 = arith.constant 5.000000e-01 : f32
    %78 = vector.broadcast %cst_38 : f32 to vector<3x128xf32>
    %79 = arith.mulf %78, %77 : vector<3x128xf32>
    %80 = arith.select %70, %79, %75 : vector<3x128xi1>, vector<3x128xf32>
    %c0_39 = arith.constant 0 : index
    %c0_40 = arith.constant 0 : index
    %81 = vector.load %arg12[%c0_39, %c0_40] : memref<3x128xf32, #tpu.memory_space<vmem>>, vector<3x128xf32>
    tpu.vector_store %arg12[%c0_39, %c0_40], %80 {strides = array<i32>} : memref<3x128xf32, #tpu.memory_space<vmem>>, vector<3x128xf32>,
    return
  }
  func.func @transform_0(%arg0: i32) -> (i32, i32) {
    %c0_i32 = arith.constant 0 : i32
    %c0_i32_0 = arith.constant 0 : i32
    return %c0_i32, %arg0 : i32, i32
  }
  func.func @transform_1(%arg0: i32) -> (i32, i32) {
    %c0_i32 = arith.constant 0 : i32
    %c0_i32_0 = arith.constant 0 : i32
    %c0_i32_1 = arith.constant 0 : i32
    return %c0_i32, %c0_i32_0 : i32, i32
  }
  func.func @transform_2(%arg0: i32) -> (i32, i32) {
    %c0_i32 = arith.constant 0 : i32
    %c0_i32_0 = arith.constant 0 : i32
    %c0_i32_1 = arith.constant 0 : i32
    return %c0_i32, %c0_i32_0 : i32, i32
  }
  func.func @transform_3(%arg0: i32) -> (i32, i32) {
    %c0_i32 = arith.constant 0 : i32
    %c0_i32_0 = arith.constant 0 : i32
    %c0_i32_1 = arith.constant 0 : i32
    return %c0_i32, %c0_i32_0 : i32, i32
  }
  func.func @transform_4(%arg0: i32) -> (i32, i32) {
    %c0_i32 = arith.constant 0 : i32
    %c0_i32_0 = arith.constant 0 : i32
    %c0_i32_1 = arith.constant 0 : i32
    return %c0_i32, %c0_i32_0 : i32, i32
  }
  func.func @transform_5(%arg0: i32) -> (i32, i32) {
    %c0_i32 = arith.constant 0 : i32
    %c0_i32_0 = arith.constant 0 : i32
    %c0_i32_1 = arith.constant 0 : i32
    return %c0_i32, %c0_i32_0 : i32, i32
  }
  func.func @transform_6(%arg0: i32) -> (i32, i32) {
    %c0_i32 = arith.constant 0 : i32
    %c0_i32_0 = arith.constant 0 : i32
    %c0_i32_1 = arith.constant 0 : i32
    return %c0_i32, %c0_i32_0 : i32, i32
  }
  func.func @transform_7(%arg0: i32) -> (i32, i32) {
    %c0_i32 = arith.constant 0 : i32
    %c0_i32_0 = arith.constant 0 : i32
    %c0_i32_1 = arith.constant 0 : i32
    return %c0_i32, %c0_i32_0 : i32, i32
  }
  func.func @transform_8(%arg0: i32) -> (i32, i32) {
    %c0_i32 = arith.constant 0 : i32
    %c0_i32_0 = arith.constant 0 : i32
    %c0_i32_1 = arith.constant 0 : i32
    return %c0_i32, %c0_i32_0 : i32, i32
  }
  func.func @transform_9(%arg0: i32) -> (i32, i32) {
    %c0_i32 = arith.constant 0 : i32
    %c0_i32_0 = arith.constant 0 : i32
    %c0_i32_1 = arith.constant 0 : i32
    return %c0_i32, %c0_i32_0 : i32, i32
  }
  func.func @transform_10(%arg0: i32) -> (i32, i32) {
    %c0_i32 = arith.constant 0 : i32
    %c0_i32_0 = arith.constant 0 : i32
    %c0_i32_1 = arith.constant 0 : i32
    return %c0_i32, %c0_i32_0 : i32, i32
  }
  func.func @transform_11(%arg0: i32) -> (i32, i32) {
    %c0_i32 = arith.constant 0 : i32
    %c0_i32_0 = arith.constant 0 : i32
    return %c0_i32, %arg0 : i32, i32
  }
}

</mosaic_0001>

<llo_original>
// kernel: tpu_custom_call.1
$region0: #{tpu_custom_call.1}
  #allocation0 [shape = 'u32[]', space=smem, size = 0x4, offset = 0x4, fixed_abs, tag = 'smem constant byte address 0x4 - core index']
  #allocation1 [shape = 'u32[144,128]{1,0:T(1,128)}', space=vmem, size = 0x12000, scoped, tag = 'internal scratch']
  %s0 = inlined_call_operand.vmem [shape: f32[16,128], index: 0, kind: input, shape index: {}]
  %s1 = inlined_call_operand.vmem [shape: f32[64,16], index: 1, kind: input, shape index: {}]
  %s2 = inlined_call_operand.vmem [shape: f32[64,1], index: 2, kind: input, shape index: {}]
  %s3 = inlined_call_operand.vmem [shape: f32[64,1], index: 3, kind: input, shape index: {}]
  %s4 = inlined_call_operand.vmem [shape: f32[64,1], index: 4, kind: input, shape index: {}]
  %s5 = inlined_call_operand.vmem [shape: f32[64,64], index: 5, kind: input, shape index: {}]
  %s6 = inlined_call_operand.vmem [shape: f32[64,1], index: 6, kind: input, shape index: {}]
  %s7 = inlined_call_operand.vmem [shape: f32[64,1], index: 7, kind: input, shape index: {}]
  %s8 = inlined_call_operand.vmem [shape: f32[64,1], index: 8, kind: input, shape index: {}]
  %s9 = inlined_call_operand.vmem [shape: f32[3,64], index: 9, kind: input, shape index: {}]
  %s10 = inlined_call_operand.vmem [shape: f32[3,1], index: 10, kind: input, shape index: {}]
  %s11 = inlined_call_operand.hbm [shape: f32[3,128], index: 11, kind: output, shape index: {}]
  %s12 = sld [smem:[#allocation0]]
  $region54: #{tpu_custom_call.1} parent=0
    _
  %s14 = ssub.s32 1, %s12
  %s15 = scalar_select 0, %s14, %s12
  $region1: #{tpu_custom_call.1} parent=0
    #allocation2 [shape = 'u8[2048]{0}', space=vmem, size = 0x800, scoped, tag = 'output window, operand 0, single buffered']
    #allocation3 [shape = 's32[1]{0}', space=sflag, size = 0x4, scoped, tag = 'scoped memory for tpu_custom_call.1']
    %16 = vsyncpa [#allocation3], 0
    // Predicated region
    $region2: #{tpu_custom_call.1} parent=1 // pred_check
      _
    $region3: #{tpu_custom_call.1} parent=1 // pred_check_branch
      %18 = sbr.rel (0) target = $region5
    $region4: #{tpu_custom_call.1} parent=1 // pred_region
      _
    $region5: #{tpu_custom_call.1} parent=1 // pred_fallthru
      _
    // Predicated region
    $region6: #{tpu_custom_call.1} parent=1 // pred_check
      _
    $region7: #{tpu_custom_call.1} parent=1 // pred_check_branch
      %20 = sbr.rel (0) target = $region9
    $region8: #{tpu_custom_call.1} parent=1 // pred_region
      _
    $region9: #{tpu_custom_call.1} parent=1 // pred_fallthru
      _
    // Predicated region
    $region10: #{tpu_custom_call.1} parent=1 // pred_check
      _
    $region11: #{tpu_custom_call.1} parent=1 // pred_check_branch
      %22 = sbr.rel (0) target = $region13
    $region12: #{tpu_custom_call.1} parent=1 // pred_region
      _
    $region13: #{tpu_custom_call.1} parent=1 // pred_fallthru
      _
    // Predicated region
    $region14: #{tpu_custom_call.1} parent=1 // pred_check
      _
    $region15: #{tpu_custom_call.1} parent=1 // pred_check_branch
      %24 = sbr.rel (0) target = $region17
    $region16: #{tpu_custom_call.1} parent=1 // pred_region
      _
    $region17: #{tpu_custom_call.1} parent=1 // pred_fallthru
      _
    // Predicated region
    $region18: #{tpu_custom_call.1} parent=1 // pred_check
      _
    $region19: #{tpu_custom_call.1} parent=1 // pred_check_branch
      %26 = sbr.rel (0) target = $region21
    $region20: #{tpu_custom_call.1} parent=1 // pred_region
      _
    $region21: #{tpu_custom_call.1} parent=1 // pred_fallthru
      _
    // Predicated region
    $region22: #{tpu_custom_call.1} parent=1 // pred_check
      _
    $region23: #{tpu_custom_call.1} parent=1 // pred_check_branch
      %28 = sbr.rel (0) target = $region25
    $region24: #{tpu_custom_call.1} parent=1 // pred_region
      _
    $region25: #{tpu_custom_call.1} parent=1 // pred_fallthru
      _
    // Predicated region
    $region26: #{tpu_custom_call.1} parent=1 // pred_check
      _
    $region27: #{tpu_custom_call.1} parent=1 // pred_check_branch
      %30 = sbr.rel (0) target = $region29
    $region28: #{tpu_custom_call.1} parent=1 // pred_region
      _
    $region29: #{tpu_custom_call.1} parent=1 // pred_fallthru
      _
    // Predicated region
    $region30: #{tpu_custom_call.1} parent=1 // pred_check
      _
    $region31: #{tpu_custom_call.1} parent=1 // pred_check_branch
      %32 = sbr.rel (0) target = $region33
    $region32: #{tpu_custom_call.1} parent=1 // pred_region
      _
    $region33: #{tpu_custom_call.1} parent=1 // pred_fallthru
      _
    // Predicated region
    $region34: #{tpu_custom_call.1} parent=1 // pred_check
      _
    $region35: #{tpu_custom_call.1} parent=1 // pred_check_branch
      %34 = sbr.rel (0) target = $region37
    $region36: #{tpu_custom_call.1} parent=1 // pred_region
      _
    $region37: #{tpu_custom_call.1} parent=1 // pred_fallthru
      _
    // Predicated region
    $region38: #{tpu_custom_call.1} parent=1 // pred_check
      _
    $region39: #{tpu_custom_call.1} parent=1 // pred_check_branch
      %36 = sbr.rel (0) target = $region41
    $region40: #{tpu_custom_call.1} parent=1 // pred_region
      _
    $region41: #{tpu_custom_call.1} parent=1 // pred_fallthru
      _
    // Predicated region
    $region42: #{tpu_custom_call.1} parent=1 // pred_check
      _
    $region43: #{tpu_custom_call.1} parent=1 // pred_check_branch
      %38 = sbr.rel (0) target = $region45
    $region44: #{tpu_custom_call.1} parent=1 // pred_region
      _
    $region45: #{tpu_custom_call.1} parent=1 // pred_fallthru
      _
    %v39 = vld [vmem:[%s0] sm:$0xff]
    %v40 = vld [vmem:[%s0 + $0x8] sm:$0xff]
    %v41 = vld [vmem:[%s1] sm:$0xff]
    %v42 = vld [vmem:[%s1 + $0x8] sm:$0xff]
    %v43 = vld [vmem:[%s1 + $0x10] sm:$0xff]
    %v44 = vld [vmem:[%s1 + $0x18] sm:$0xff]
    %v45 = vld [vmem:[%s1 + $0x20] sm:$0xff]
    %v46 = vld [vmem:[%s1 + $0x28] sm:$0xff]
    %v47 = vld [vmem:[%s1 + $0x30] sm:$0xff]
    %v48 = vld [vmem:[%s1 + $0x38] sm:$0xff]
    %v49 = vld [vmem:[%s2] sm:$0xff]
    %v50 = vld [vmem:[%s2 + $0x8] sm:$0xff]
    %v51 = vld [vmem:[%s2 + $0x10] sm:$0xff]
    %v52 = vld [vmem:[%s2 + $0x18] sm:$0xff]
    %v53 = vld [vmem:[%s2 + $0x20] sm:$0xff]
    %v54 = vld [vmem:[%s2 + $0x28] sm:$0xff]
    %v55 = vld [vmem:[%s2 + $0x30] sm:$0xff]
    %v56 = vld [vmem:[%s2 + $0x38] sm:$0xff]
    %58 = vset.pattern.permute.xlu0 0
    %59 = vperm.xlu0 %58, %v49
    %v60 = vpop.permute.xlu0 %59
    %63 = vset.pattern.permute.xlu0 0
    %64 = vperm.xlu0 %63, %v50
    %v65 = vpop.permute.xlu0 %64
    %68 = vset.pattern.permute.xlu0 0
    %69 = vperm.xlu0 %68, %v51
    %v70 = vpop.permute.xlu0 %69
    %73 = vset.pattern.permute.xlu0 0
    %74 = vperm.xlu0 %73, %v52
    %v75 = vpop.permute.xlu0 %74
    %78 = vset.pattern.permute.xlu0 0
    %79 = vperm.xlu0 %78, %v53
    %v80 = vpop.permute.xlu0 %79
    %83 = vset.pattern.permute.xlu0 0
    %84 = vperm.xlu0 %83, %v54
    %v85 = vpop.permute.xlu0 %84
    %88 = vset.pattern.permute.xlu0 0
    %89 = vperm.xlu0 %88, %v55
    %v90 = vpop.permute.xlu0 %89
    %93 = vset.pattern.permute.xlu0 0
    %94 = vperm.xlu0 %93, %v56
    %v95 = vpop.permute.xlu0 %94
    %vm97 = vcmask 130048
    %v99 = vsel %vm97, %v41, 0
    %v102 = vsel %vm97, %v42, 0
    %v105 = vsel %vm97, %v43, 0
    %v108 = vsel %vm97, %v44, 0
    %v111 = vsel %vm97, %v45, 0
    %v114 = vsel %vm97, %v46, 0
    %v117 = vsel %vm97, %v47, 0
    %v120 = vsel %vm97, %v48, 0
    %122 = vmatprep.subr.mxu0 0.0
    %123 = vmatpush1.msra.mxu0 0.0
    %124 = vmatprep.subr.mxu0 0.0
    %125 = vmatpush1.msra.mxu0 0.0
    %126 = vmatprep.subr.mxu0 0.0
    %127 = vmatpush1.msra.mxu0 0.0
    %128 = vmatprep.subr.mxu0 0.0
    %129 = vmatpush1.msra.mxu0 0.0
    %130 = vmatprep.subr.mxu0 0.0
    %131 = vmatpush1.msra.mxu0 0.0
    %132 = vmatprep.subr.mxu0 0.0
    %133 = vmatpush1.msra.mxu0 0.0
    %134 = vmatprep.subr.mxu0 0.0
    %135 = vmatpush1.msra.mxu0 0.0
    %136 = vmatprep.subr.mxu0 0.0
    %137 = vmatpush1.msra.mxu0 0.0
    %138 = vmatprep.subr.mxu0 0.0
    %139 = vmatpush1.msra.mxu0 0.0
    %140 = vmatprep.subr.mxu0 0.0
    %141 = vmatpush1.msra.mxu0 0.0
    %142 = vmatprep.subr.mxu0 0.0
    %143 = vmatpush1.msra.mxu0 0.0
    %144 = vmatprep.subr.mxu0 0.0
    %145 = vmatpush1.msra.mxu0 0.0
    %146 = vmatprep.subr.mxu0 0.0
    %147 = vmatpush1.msra.mxu0 0.0
    %148 = vmatprep.subr.mxu0 0.0
    %149 = vmatpush1.msra.mxu0 0.0
    %150 = vmatprep.subr.mxu0 0.0
    %151 = vmatpush1.msra.mxu0 %v40
    %152 = vmatprep.subr.mxu0 0.0
    %153 = vmatpush1.msra.mxu0 %v39
    %154 = vmatprep.subr.mxu0 0.0
    %155 = vmatpush2.msra.mxu0 0.0
    %156 = vmatprep.subr.mxu0 0.0
    %157 = vmatpush2.msra.mxu0 0.0
    %158 = vmatprep.subr.mxu0 0.0
    %159 = vmatpush2.msra.mxu0 0.0
    %160 = vmatprep.subr.mxu0 0.0
    %161 = vmatpush2.msra.mxu0 0.0
    %162 = vmatprep.subr.mxu0 0.0
    %163 = vmatpush2.msra.mxu0 0.0
    %164 = vmatprep.subr.mxu0 0.0
    %165 = vmatpush2.msra.mxu0 0.0
    %166 = vmatprep.subr.mxu0 0.0
    %167 = vmatpush2.msra.mxu0 0.0
    %168 = vmatprep.subr.mxu0 0.0
    %169 = vmatpush2.msra.mxu0 0.0
    %170 = vmatprep.subr.mxu0 0.0
    %171 = vmatpush2.msra.mxu0 0.0
    %172 = vmatprep.subr.mxu0 0.0
    %173 = vmatpush2.msra.mxu0 0.0
    %174 = vmatprep.subr.mxu0 0.0
    %175 = vmatpush2.msra.mxu0 0.0
    %176 = vmatprep.subr.mxu0 0.0
    %177 = vmatpush2.msra.mxu0 0.0
    %178 = vmatprep.subr.mxu0 0.0
    %179 = vmatpush2.msra.mxu0 0.0
    %180 = vmatprep.subr.mxu0 0.0
    %181 = vmatpush2.msra.mxu0 0.0
    %182 = vmatprep.subr.mxu0 0.0
    %183 = vmatpush2.msra.mxu0 0.0
    %184 = vmatprep.subr.mxu0 0.0
    %185 = vmatpush2.msra.mxu0 0.0
    %186 = vmatprep.mubr.f32.mxu0 0.0
    %187 = vmatmul.mubr.f32.gmra.mxu0 %v99
    %v188 = vpop.f32.mrf.mxu0
    %v189 = vadd.f32 %v60, %v188
    %v190 = vpop.f32.mrf.mxu0
    %191 = vmatprep.mubr.f32.mxu0 0.0
    %192 = vmatmul.mubr.f32.gmra.mxu0 %v102
    %v193 = vpop.f32.mrf.mxu0
    %v194 = vadd.f32 %v65, %v193
    %v195 = vpop.f32.mrf.mxu0
    %196 = vmatprep.mubr.f32.mxu0 0.0
    %197 = vmatmul.mubr.f32.gmra.mxu0 %v105
    %v198 = vpop.f32.mrf.mxu0
    %v199 = vadd.f32 %v70, %v198
    %v200 = vpop.f32.mrf.mxu0
    %201 = vmatprep.mubr.f32.mxu0 0.0
    %202 = vmatmul.mubr.f32.gmra.mxu0 %v108
    %v203 = vpop.f32.mrf.mxu0
    %v204 = vadd.f32 %v75, %v203
    %v205 = vpop.f32.mrf.mxu0
    %206 = vmatprep.mubr.f32.mxu0 0.0
    %207 = vmatmul.mubr.f32.gmra.mxu0 %v111
    %v208 = vpop.f32.mrf.mxu0
    %v209 = vadd.f32 %v80, %v208
    %v210 = vpop.f32.mrf.mxu0
    %211 = vmatprep.mubr.f32.mxu0 0.0
    %212 = vmatmul.mubr.f32.gmra.mxu0 %v114
    %v213 = vpop.f32.mrf.mxu0
    %v214 = vadd.f32 %v85, %v213
    %v215 = vpop.f32.mrf.mxu0
    %216 = vmatprep.mubr.f32.mxu0 0.0
    %217 = vmatmul.mubr.f32.gmra.mxu0 %v117
    %v218 = vpop.f32.mrf.mxu0
    %v219 = vadd.f32 %v90, %v218
    %v220 = vpop.f32.mrf.mxu0
    %221 = vmatprep.mubr.f32.mxu0 0.0
    %222 = vmatmul.mubr.f32.gmra.mxu0 %v120
    %v223 = vpop.f32.mrf.mxu0
    %v224 = vadd.f32 %v95, %v223
    %v225 = vpop.f32.mrf.mxu0
    %226 = vdwg.mxu0
    %v227 = vld [vmem:[%s3] sm:$0xff]
    %v228 = vld [vmem:[%s3 + $0x8] sm:$0xff]
    %v229 = vld [vmem:[%s3 + $0x10] sm:$0xff]
    %v230 = vld [vmem:[%s3 + $0x18] sm:$0xff]
    %v231 = vld [vmem:[%s3 + $0x20] sm:$0xff]
    %v232 = vld [vmem:[%s3 + $0x28] sm:$0xff]
    %v233 = vld [vmem:[%s3 + $0x30] sm:$0xff]
    %v234 = vld [vmem:[%s3 + $0x38] sm:$0xff]
    %v235 = vld [vmem:[%s4] sm:$0xff]
    %v236 = vld [vmem:[%s4 + $0x8] sm:$0xff]
    %v237 = vld [vmem:[%s4 + $0x10] sm:$0xff]
    %v238 = vld [vmem:[%s4 + $0x18] sm:$0xff]
    %v239 = vld [vmem:[%s4 + $0x20] sm:$0xff]
    %v240 = vld [vmem:[%s4 + $0x28] sm:$0xff]
    %v241 = vld [vmem:[%s4 + $0x30] sm:$0xff]
    %v242 = vld [vmem:[%s4 + $0x38] sm:$0xff]
    %v243 = vadd.f32 %v189, %v194
    %v244 = vadd.f32 %v243, %v199
    %v245 = vadd.f32 %v244, %v204
    %v246 = vadd.f32 %v245, %v209
    %v247 = vadd.f32 %v246, %v214
    %v248 = vadd.f32 %v247, %v219
    %v249 = vadd.f32 %v248, %v224
    %v250 = vrot.slane %v249, 4
    %v251 = vadd.f32 %v249, %v250
    %v252 = vrot.slane %v251, 2
    %v253 = vadd.f32 %v251, %v252
    %v254 = vrot.slane %v253, 1
    %v255 = vadd.f32 %v253, %v254
    %v256 = vmul.f32 %v189, %v189
    %v257 = vmul.f32 %v194, %v194
    %v258 = vmul.f32 %v199, %v199
    %v259 = vmul.f32 %v204, %v204
    %v260 = vmul.f32 %v209, %v209
    %v261 = vmul.f32 %v214, %v214
    %v262 = vmul.f32 %v219, %v219
    %v263 = vmul.f32 %v224, %v224
    %v264 = vadd.f32 %v256, %v257
    %v265 = vadd.f32 %v264, %v258
    %v266 = vadd.f32 %v265, %v259
    %v267 = vadd.f32 %v266, %v260
    %v268 = vadd.f32 %v267, %v261
    %v269 = vadd.f32 %v268, %v262
    %v270 = vadd.f32 %v269, %v263
    %v271 = vrot.slane %v270, 4
    %v272 = vadd.f32 %v270, %v271
    %v273 = vrot.slane %v272, 2
    %v274 = vadd.f32 %v272, %v273
    %v275 = vrot.slane %v274, 1
    %v276 = vadd.f32 %v274, %v275
    %v277 = vmul.f32 %v255, 0.015625
    %v278 = vmul.f32 %v276, 0.015625
    %v279 = vmul.f32 %v277, %v277
    %v280 = vsub.f32 %v278, %v279
    %v281 = vsub.f32 %v189, %v277
    %v282 = vsub.f32 %v194, %v277
    %v283 = vsub.f32 %v199, %v277
    %v284 = vsub.f32 %v204, %v277
    %v285 = vsub.f32 %v209, %v277
    %v286 = vsub.f32 %v214, %v277
    %v287 = vsub.f32 %v219, %v277
    %v288 = vsub.f32 %v224, %v277
    %v289 = vadd.f32 %v280, 1e-05
    %v290 = vrsqrt.pop %v289
    %v291 = vmul.f32 %v281, %v290
    %v292 = vmul.f32 %v282, %v290
    %v293 = vmul.f32 %v283, %v290
    %v294 = vmul.f32 %v284, %v290
    %v295 = vmul.f32 %v285, %v290
    %v296 = vmul.f32 %v286, %v290
    %v297 = vmul.f32 %v287, %v290
    %v298 = vmul.f32 %v288, %v290
    %300 = vset.pattern.permute.xlu0 0
    %301 = vperm.xlu0 %300, %v227
    %v302 = vpop.permute.xlu0 %301
    %305 = vset.pattern.permute.xlu0 0
    %306 = vperm.xlu0 %305, %v228
    %v307 = vpop.permute.xlu0 %306
    %310 = vset.pattern.permute.xlu0 0
    %311 = vperm.xlu0 %310, %v229
    %v312 = vpop.permute.xlu0 %311
    %315 = vset.pattern.permute.xlu0 0
    %316 = vperm.xlu0 %315, %v230
    %v317 = vpop.permute.xlu0 %316
    %320 = vset.pattern.permute.xlu0 0
    %321 = vperm.xlu0 %320, %v231
    %v322 = vpop.permute.xlu0 %321
    %325 = vset.pattern.permute.xlu0 0
    %326 = vperm.xlu0 %325, %v232
    %v327 = vpop.permute.xlu0 %326
    %330 = vset.pattern.permute.xlu0 0
    %331 = vperm.xlu0 %330, %v233
    %v332 = vpop.permute.xlu0 %331
    %335 = vset.pattern.permute.xlu0 0
    %336 = vperm.xlu0 %335, %v234
    %v337 = vpop.permute.xlu0 %336
    %v339 = vmul.f32 %v291, %v302
    %v340 = vmul.f32 %v292, %v307
    %v341 = vmul.f32 %v293, %v312
    %v342 = vmul.f32 %v294, %v317
    %v343 = vmul.f32 %v295, %v322
    %v344 = vmul.f32 %v296, %v327
    %v345 = vmul.f32 %v297, %v332
    %v346 = vmul.f32 %v298, %v337
    %348 = vset.pattern.permute.xlu0 0
    %349 = vperm.xlu0 %348, %v235
    %v350 = vpop.permute.xlu0 %349
    %353 = vset.pattern.permute.xlu0 0
    %354 = vperm.xlu0 %353, %v236
    %v355 = vpop.permute.xlu0 %354
    %358 = vset.pattern.permute.xlu0 0
    %359 = vperm.xlu0 %358, %v237
    %v360 = vpop.permute.xlu0 %359
    %363 = vset.pattern.permute.xlu0 0
    %364 = vperm.xlu0 %363, %v238
    %v365 = vpop.permute.xlu0 %364
    %368 = vset.pattern.permute.xlu0 0
    %369 = vperm.xlu0 %368, %v239
    %v370 = vpop.permute.xlu0 %369
    %373 = vset.pattern.permute.xlu0 0
    %374 = vperm.xlu0 %373, %v240
    %v375 = vpop.permute.xlu0 %374
    %378 = vset.pattern.permute.xlu0 0
    %379 = vperm.xlu0 %378, %v241
    %v380 = vpop.permute.xlu0 %379
    %383 = vset.pattern.permute.xlu0 0
    %384 = vperm.xlu0 %383, %v242
    %v385 = vpop.permute.xlu0 %384
    %v387 = vadd.f32 %v339, %v350
    %v388 = vadd.f32 %v340, %v355
    %v389 = vadd.f32 %v341, %v360
    %v390 = vadd.f32 %v342, %v365
    %v391 = vadd.f32 %v343, %v370
    %v392 = vadd.f32 %v344, %v375
    %v393 = vadd.f32 %v345, %v380
    %v394 = vadd.f32 %v346, %v385
    %v395 = vmax.f32 %v387, 0.0
    %v396 = vmax.f32 %v388, 0.0
    %v397 = vmax.f32 %v389, 0.0
    %v398 = vmax.f32 %v390, 0.0
    %v399 = vmax.f32 %v391, 0.0
    %v400 = vmax.f32 %v392, 0.0
    %v401 = vmax.f32 %v393, 0.0
    %v402 = vmax.f32 %v394, 0.0
    %v403 = vld [vmem:[%s5] sm:$0xff]
    %v404 = vld [vmem:[%s5 + $0x8] sm:$0xff]
    %v405 = vld [vmem:[%s5 + $0x10] sm:$0xff]
    %v406 = vld [vmem:[%s5 + $0x18] sm:$0xff]
    %v407 = vld [vmem:[%s5 + $0x20] sm:$0xff]
    %v408 = vld [vmem:[%s5 + $0x28] sm:$0xff]
    %v409 = vld [vmem:[%s5 + $0x30] sm:$0xff]
    %v410 = vld [vmem:[%s5 + $0x38] sm:$0xff]
    %v411 = vld [vmem:[%s6] sm:$0xff]
    %v412 = vld [vmem:[%s6 + $0x8] sm:$0xff]
    %v413 = vld [vmem:[%s6 + $0x10] sm:$0xff]
    %v414 = vld [vmem:[%s6 + $0x18] sm:$0xff]
    %v415 = vld [vmem:[%s6 + $0x20] sm:$0xff]
    %v416 = vld [vmem:[%s6 + $0x28] sm:$0xff]
    %v417 = vld [vmem:[%s6 + $0x30] sm:$0xff]
    %v418 = vld [vmem:[%s6 + $0x38] sm:$0xff]
    %420 = vset.pattern.permute.xlu0 0
    %421 = vperm.xlu0 %420, %v411
    %v422 = vpop.permute.xlu0 %421
    %425 = vset.pattern.permute.xlu0 0
    %426 = vperm.xlu0 %425, %v412
    %v427 = vpop.permute.xlu0 %426
    %430 = vset.pattern.permute.xlu0 0
    %431 = vperm.xlu0 %430, %v413
    %v432 = vpop.permute.xlu0 %431
    %435 = vset.pattern.permute.xlu0 0
    %436 = vperm.xlu0 %435, %v414
    %v437 = vpop.permute.xlu0 %436
    %440 = vset.pattern.permute.xlu0 0
    %441 = vperm.xlu0 %440, %v415
    %v442 = vpop.permute.xlu0 %441
    %445 = vset.pattern.permute.xlu0 0
    %446 = vperm.xlu0 %445, %v416
    %v447 = vpop.permute.xlu0 %446
    %450 = vset.pattern.permute.xlu0 0
    %451 = vperm.xlu0 %450, %v417
    %v452 = vpop.permute.xlu0 %451
    %455 = vset.pattern.permute.xlu0 0
    %456 = vperm.xlu0 %455, %v418
    %v457 = vpop.permute.xlu0 %456
    %vm459 = vcmask 523264
    %v461 = vsel %vm459, %v403, 0
    %v464 = vsel %vm459, %v404, 0
    %v467 = vsel %vm459, %v405, 0
    %v470 = vsel %vm459, %v406, 0
    %v473 = vsel %vm459, %v407, 0
    %v476 = vsel %vm459, %v408, 0
    %v479 = vsel %vm459, %v409, 0
    %v482 = vsel %vm459, %v410, 0
    %484 = vmatprep.subr.mxu0 0.0
    %485 = vmatpush1.msra.mxu0 0.0
    %486 = vmatprep.subr.mxu0 0.0
    %487 = vmatpush1.msra.mxu0 0.0
    %488 = vmatprep.subr.mxu0 0.0
    %489 = vmatpush1.msra.mxu0 0.0
    %490 = vmatprep.subr.mxu0 0.0
    %491 = vmatpush1.msra.mxu0 0.0
    %492 = vmatprep.subr.mxu0 0.0
    %493 = vmatpush1.msra.mxu0 0.0
    %494 = vmatprep.subr.mxu0 0.0
    %495 = vmatpush1.msra.mxu0 0.0
    %496 = vmatprep.subr.mxu0 0.0
    %497 = vmatpush1.msra.mxu0 0.0
    %498 = vmatprep.subr.mxu0 0.0
    %499 = vmatpush1.msra.mxu0 0.0
    %500 = vmatprep.subr.mxu0 0.0
    %501 = vmatpush1.msra.mxu0 %v402
    %502 = vmatprep.subr.mxu0 0.0
    %503 = vmatpush1.msra.mxu0 %v401
    %504 = vmatprep.subr.mxu0 0.0
    %505 = vmatpush1.msra.mxu0 %v400
    %506 = vmatprep.subr.mxu0 0.0
    %507 = vmatpush1.msra.mxu0 %v399
    %508 = vmatprep.subr.mxu0 0.0
    %509 = vmatpush1.msra.mxu0 %v398
    %510 = vmatprep.subr.mxu0 0.0
    %511 = vmatpush1.msra.mxu0 %v397
    %512 = vmatprep.subr.mxu0 0.0
    %513 = vmatpush1.msra.mxu0 %v396
    %514 = vmatprep.subr.mxu0 0.0
    %515 = vmatpush1.msra.mxu0 %v395
    %516 = vmatprep.subr.mxu0 0.0
    %517 = vmatpush2.msra.mxu0 0.0
    %518 = vmatprep.subr.mxu0 0.0
    %519 = vmatpush2.msra.mxu0 0.0
    %520 = vmatprep.subr.mxu0 0.0
    %521 = vmatpush2.msra.mxu0 0.0
    %522 = vmatprep.subr.mxu0 0.0
    %523 = vmatpush2.msra.mxu0 0.0
    %524 = vmatprep.subr.mxu0 0.0
    %525 = vmatpush2.msra.mxu0 0.0
    %526 = vmatprep.subr.mxu0 0.0
    %527 = vmatpush2.msra.mxu0 0.0
    %528 = vmatprep.subr.mxu0 0.0
    %529 = vmatpush2.msra.mxu0 0.0
    %530 = vmatprep.subr.mxu0 0.0
    %531 = vmatpush2.msra.mxu0 0.0
    %532 = vmatprep.subr.mxu0 0.0
    %533 = vmatpush2.msra.mxu0 0.0
    %534 = vmatprep.subr.mxu0 0.0
    %535 = vmatpush2.msra.mxu0 0.0
    %536 = vmatprep.subr.mxu0 0.0
    %537 = vmatpush2.msra.mxu0 0.0
    %538 = vmatprep.subr.mxu0 0.0
    %539 = vmatpush2.msra.mxu0 0.0
    %540 = vmatprep.subr.mxu0 0.0
    %541 = vmatpush2.msra.mxu0 0.0
    %542 = vmatprep.subr.mxu0 0.0
    %543 = vmatpush2.msra.mxu0 0.0
    %544 = vmatprep.subr.mxu0 0.0
    %545 = vmatpush2.msra.mxu0 0.0
    %546 = vmatprep.subr.mxu0 0.0
    %547 = vmatpush2.msra.mxu0 0.0
    %548 = vmatprep.mubr.f32.mxu0 0.0
    %549 = vmatmul.mubr.f32.gmra.mxu0 %v461
    %v550 = vpop.f32.mrf.mxu0
    %v551 = vadd.f32 %v422, %v550
    %v552 = vpop.f32.mrf.mxu0
    %553 = vmatprep.mubr.f32.mxu0 0.0
    %554 = vmatmul.mubr.f32.gmra.mxu0 %v464
    %v555 = vpop.f32.mrf.mxu0
    %v556 = vadd.f32 %v427, %v555
    %v557 = vpop.f32.mrf.mxu0
    %558 = vmatprep.mubr.f32.mxu0 0.0
    %559 = vmatmul.mubr.f32.gmra.mxu0 %v467
    %v560 = vpop.f32.mrf.mxu0
    %v561 = vadd.f32 %v432, %v560
    %v562 = vpop.f32.mrf.mxu0
    %563 = vmatprep.mubr.f32.mxu0 0.0
    %564 = vmatmul.mubr.f32.gmra.mxu0 %v470
    %v565 = vpop.f32.mrf.mxu0
    %v566 = vadd.f32 %v437, %v565
    %v567 = vpop.f32.mrf.mxu0
    %568 = vmatprep.mubr.f32.mxu0 0.0
    %569 = vmatmul.mubr.f32.gmra.mxu0 %v473
    %v570 = vpop.f32.mrf.mxu0
    %v571 = vadd.f32 %v442, %v570
    %v572 = vpop.f32.mrf.mxu0
    %573 = vmatprep.mubr.f32.mxu0 0.0
    %574 = vmatmul.mubr.f32.gmra.mxu0 %v476
    %v575 = vpop.f32.mrf.mxu0
    %v576 = vadd.f32 %v447, %v575
    %v577 = vpop.f32.mrf.mxu0
    %578 = vmatprep.mubr.f32.mxu0 0.0
    %579 = vmatmul.mubr.f32.gmra.mxu0 %v479
    %v580 = vpop.f32.mrf.mxu0
    %v581 = vadd.f32 %v452, %v580
    %v582 = vpop.f32.mrf.mxu0
    %583 = vmatprep.mubr.f32.mxu0 0.0
    %584 = vmatmul.mubr.f32.gmra.mxu0 %v482
    %v585 = vpop.f32.mrf.mxu0
    %v586 = vadd.f32 %v457, %v585
    %v587 = vpop.f32.mrf.mxu0
    %588 = vdwg.mxu0
    %v589 = vld [vmem:[%s7] sm:$0xff]
    %v590 = vld [vmem:[%s7 + $0x8] sm:$0xff]
    %v591 = vld [vmem:[%s7 + $0x10] sm:$0xff]
    %v592 = vld [vmem:[%s7 + $0x18] sm:$0xff]
    %v593 = vld [vmem:[%s7 + $0x20] sm:$0xff]
    %v594 = vld [vmem:[%s7 + $0x28] sm:$0xff]
    %v595 = vld [vmem:[%s7 + $0x30] sm:$0xff]
    %v596 = vld [vmem:[%s7 + $0x38] sm:$0xff]
    %v597 = vld [vmem:[%s8] sm:$0xff]
    %v598 = vld [vmem:[%s8 + $0x8] sm:$0xff]
    %v599 = vld [vmem:[%s8 + $0x10] sm:$0xff]
    %v600 = vld [vmem:[%s8 + $0x18] sm:$0xff]
    %v601 = vld [vmem:[%s8 + $0x20] sm:$0xff]
    %v602 = vld [vmem:[%s8 + $0x28] sm:$0xff]
    %v603 = vld [vmem:[%s8 + $0x30] sm:$0xff]
    %v604 = vld [vmem:[%s8 + $0x38] sm:$0xff]
    %v605 = vadd.f32 %v551, %v556
    %v606 = vadd.f32 %v605, %v561
    %v607 = vadd.f32 %v606, %v566
    %v608 = vadd.f32 %v607, %v571
    %v609 = vadd.f32 %v608, %v576
    %v610 = vadd.f32 %v609, %v581
    %v611 = vadd.f32 %v610, %v586
    %v612 = vrot.slane %v611, 4
    %v613 = vadd.f32 %v611, %v612
    %v614 = vrot.slane %v613, 2
    %v615 = vadd.f32 %v613, %v614
    %v616 = vrot.slane %v615, 1
    %v617 = vadd.f32 %v615, %v616
    %v618 = vmul.f32 %v551, %v551
    %v619 = vmul.f32 %v556, %v556
    %v620 = vmul.f32 %v561, %v561
    %v621 = vmul.f32 %v566, %v566
    %v622 = vmul.f32 %v571, %v571
    %v623 = vmul.f32 %v576, %v576
    %v624 = vmul.f32 %v581, %v581
    %v625 = vmul.f32 %v586, %v586
    %v626 = vadd.f32 %v618, %v619
    %v627 = vadd.f32 %v626, %v620
    %v628 = vadd.f32 %v627, %v621
    %v629 = vadd.f32 %v628, %v622
    %v630 = vadd.f32 %v629, %v623
    %v631 = vadd.f32 %v630, %v624
    %v632 = vadd.f32 %v631, %v625
    %v633 = vrot.slane %v632, 4
    %v634 = vadd.f32 %v632, %v633
    %v635 = vrot.slane %v634, 2
    %v636 = vadd.f32 %v634, %v635
    %v637 = vrot.slane %v636, 1
    %v638 = vadd.f32 %v636, %v637
    %v639 = vmul.f32 %v617, 0.015625
    %v640 = vmul.f32 %v638, 0.015625
    %v641 = vmul.f32 %v639, %v639
    %v642 = vsub.f32 %v640, %v641
    %v643 = vsub.f32 %v551, %v639
    %v644 = vsub.f32 %v556, %v639
    %v645 = vsub.f32 %v561, %v639
    %v646 = vsub.f32 %v566, %v639
    %v647 = vsub.f32 %v571, %v639
    %v648 = vsub.f32 %v576, %v639
    %v649 = vsub.f32 %v581, %v639
    %v650 = vsub.f32 %v586, %v639
    %v651 = vadd.f32 %v642, 1e-05
    %v652 = vrsqrt.pop %v651
    %v653 = vmul.f32 %v643, %v652
    %v654 = vmul.f32 %v644, %v652
    %v655 = vmul.f32 %v645, %v652
    %v656 = vmul.f32 %v646, %v652
    %v657 = vmul.f32 %v647, %v652
    %v658 = vmul.f32 %v648, %v652
    %v659 = vmul.f32 %v649, %v652
    %v660 = vmul.f32 %v650, %v652
    %662 = vset.pattern.permute.xlu0 0
    %663 = vperm.xlu0 %662, %v589
    %v664 = vpop.permute.xlu0 %663
    %667 = vset.pattern.permute.xlu0 0
    %668 = vperm.xlu0 %667, %v590
    %v669 = vpop.permute.xlu0 %668
    %672 = vset.pattern.permute.xlu0 0
    %673 = vperm.xlu0 %672, %v591
    %v674 = vpop.permute.xlu0 %673
    %677 = vset.pattern.permute.xlu0 0
    %678 = vperm.xlu0 %677, %v592
    %v679 = vpop.permute.xlu0 %678
    %682 = vset.pattern.permute.xlu0 0
    %683 = vperm.xlu0 %682, %v593
    %v684 = vpop.permute.xlu0 %683
    %687 = vset.pattern.permute.xlu0 0
    %688 = vperm.xlu0 %687, %v594
    %v689 = vpop.permute.xlu0 %688
    %692 = vset.pattern.permute.xlu0 0
    %693 = vperm.xlu0 %692, %v595
    %v694 = vpop.permute.xlu0 %693
    %697 = vset.pattern.permute.xlu0 0
    %698 = vperm.xlu0 %697, %v596
    %v699 = vpop.permute.xlu0 %698
    %v701 = vmul.f32 %v653, %v664
    %v702 = vmul.f32 %v654, %v669
    %v703 = vmul.f32 %v655, %v674
    %v704 = vmul.f32 %v656, %v679
    %v705 = vmul.f32 %v657, %v684
    %v706 = vmul.f32 %v658, %v689
    %v707 = vmul.f32 %v659, %v694
    %v708 = vmul.f32 %v660, %v699
    %710 = vset.pattern.permute.xlu0 0
    %711 = vperm.xlu0 %710, %v597
    %v712 = vpop.permute.xlu0 %711
    %715 = vset.pattern.permute.xlu0 0
    %716 = vperm.xlu0 %715, %v598
    %v717 = vpop.permute.xlu0 %716
    %720 = vset.pattern.permute.xlu0 0
    %721 = vperm.xlu0 %720, %v599
    %v722 = vpop.permute.xlu0 %721
    %725 = vset.pattern.permute.xlu0 0
    %726 = vperm.xlu0 %725, %v600
    %v727 = vpop.permute.xlu0 %726
    %730 = vset.pattern.permute.xlu0 0
    %731 = vperm.xlu0 %730, %v601
    %v732 = vpop.permute.xlu0 %731
    %735 = vset.pattern.permute.xlu0 0
    %736 = vperm.xlu0 %735, %v602
    %v737 = vpop.permute.xlu0 %736
    %740 = vset.pattern.permute.xlu0 0
    %741 = vperm.xlu0 %740, %v603
    %v742 = vpop.permute.xlu0 %741
    %745 = vset.pattern.permute.xlu0 0
    %746 = vperm.xlu0 %745, %v604
    %v747 = vpop.permute.xlu0 %746
    %v749 = vadd.f32 %v701, %v712
    %v750 = vadd.f32 %v702, %v717
    %v751 = vadd.f32 %v703, %v722
    %v752 = vadd.f32 %v704, %v727
    %v753 = vadd.f32 %v705, %v732
    %v754 = vadd.f32 %v706, %v737
    %v755 = vadd.f32 %v707, %v742
    %v756 = vadd.f32 %v708, %v747
    %v757 = vmax.f32 %v749, 0.0
    %v758 = vmax.f32 %v750, 0.0
    %v759 = vmax.f32 %v751, 0.0
    %v760 = vmax.f32 %v752, 0.0
    %v761 = vmax.f32 %v753, 0.0
    %v762 = vmax.f32 %v754, 0.0
    %v763 = vmax.f32 %v755, 0.0
    %v764 = vmax.f32 %v756, 0.0
    %v765 = vld [vmem:[%s9] sm:$0x7]
    %v766 = vld [vmem:[%s10] sm:$0x7]
    %768 = vset.pattern.permute.xlu0 0
    %769 = vperm.xlu0 %768, %v766
    %v770 = vpop.permute.xlu0 %769
    %v773 = vsel %vm459, %v765, 0
    %775 = vmatprep.subr.mxu0 0.0
    %776 = vmatpush1.msra.mxu0 0.0
    %777 = vmatprep.subr.mxu0 0.0
    %778 = vmatpush1.msra.mxu0 0.0
    %779 = vmatprep.subr.mxu0 0.0
    %780 = vmatpush1.msra.mxu0 0.0
    %781 = vmatprep.subr.mxu0 0.0
    %782 = vmatpush1.msra.mxu0 0.0
    %783 = vmatprep.subr.mxu0 0.0
    %784 = vmatpush1.msra.mxu0 0.0
    %785 = vmatprep.subr.mxu0 0.0
    %786 = vmatpush1.msra.mxu0 0.0
    %787 = vmatprep.subr.mxu0 0.0
    %788 = vmatpush1.msra.mxu0 0.0
    %789 = vmatprep.subr.mxu0 0.0
    %790 = vmatpush1.msra.mxu0 0.0
    %791 = vmatprep.subr.mxu0 0.0
    %792 = vmatpush1.msra.mxu0 %v764
    %793 = vmatprep.subr.mxu0 0.0
    %794 = vmatpush1.msra.mxu0 %v763
    %795 = vmatprep.subr.mxu0 0.0
    %796 = vmatpush1.msra.mxu0 %v762
    %797 = vmatprep.subr.mxu0 0.0
    %798 = vmatpush1.msra.mxu0 %v761
    %799 = vmatprep.subr.mxu0 0.0
    %800 = vmatpush1.msra.mxu0 %v760
    %801 = vmatprep.subr.mxu0 0.0
    %802 = vmatpush1.msra.mxu0 %v759
    %803 = vmatprep.subr.mxu0 0.0
    %804 = vmatpush1.msra.mxu0 %v758
    %805 = vmatprep.subr.mxu0 0.0
    %806 = vmatpush1.msra.mxu0 %v757
    %807 = vmatprep.subr.mxu0 0.0
    %808 = vmatpush2.msra.mxu0 0.0
    %809 = vmatprep.subr.mxu0 0.0
    %810 = vmatpush2.msra.mxu0 0.0
    %811 = vmatprep.subr.mxu0 0.0
    %812 = vmatpush2.msra.mxu0 0.0
    %813 = vmatprep.subr.mxu0 0.0
    %814 = vmatpush2.msra.mxu0 0.0
    %815 = vmatprep.subr.mxu0 0.0
    %816 = vmatpush2.msra.mxu0 0.0
    %817 = vmatprep.subr.mxu0 0.0
    %818 = vmatpush2.msra.mxu0 0.0
    %819 = vmatprep.subr.mxu0 0.0
    %820 = vmatpush2.msra.mxu0 0.0
    %821 = vmatprep.subr.mxu0 0.0
    %822 = vmatpush2.msra.mxu0 0.0
    %823 = vmatprep.subr.mxu0 0.0
    %824 = vmatpush2.msra.mxu0 0.0
    %825 = vmatprep.subr.mxu0 0.0
    %826 = vmatpush2.msra.mxu0 0.0
    %827 = vmatprep.subr.mxu0 0.0
    %828 = vmatpush2.msra.mxu0 0.0
    %829 = vmatprep.subr.mxu0 0.0
    %830 = vmatpush2.msra.mxu0 0.0
    %831 = vmatprep.subr.mxu0 0.0
    %832 = vmatpush2.msra.mxu0 0.0
    %833 = vmatprep.subr.mxu0 0.0
    %834 = vmatpush2.msra.mxu0 0.0
    %835 = vmatprep.subr.mxu0 0.0
    %836 = vmatpush2.msra.mxu0 0.0
    %837 = vmatprep.subr.mxu0 0.0
    %838 = vmatpush2.msra.mxu0 0.0
    %839 = vmatprep.mubr.f32.mxu0 0.0
    %840 = vmatmul.mubr.f32.gmra.mxu0 %v773
    %v841 = vpop.f32.mrf.mxu0
    %v842 = vadd.f32 %v770, %v841
    %v843 = vpop.f32.mrf.mxu0
    %844 = vdwg.mxu0
    %v845 = vlaneseq
    %v846 = vshrl.u32 %v845, 7
    %vm847 = vcmp.eq.s32.totalorder %v846, 0
    %v848 = vsel %vm847, 0.5, 1.0
    %v849 = vmul.f32 %v842, %v848
    %v850 = vtanh.pop %v849
    %v851 = vadd.f32 %v850, 1.0
    %v852 = vmul.f32 %v851, 0.5
    %v853 = vsel %vm847, %v852, %v850
    %854 = vst [vmem:[#allocation2] sm:$0x7] %v853
    // Predicated region
    $region46: #{tpu_custom_call.1} parent=1 // pred_check
      _
    $region47: #{tpu_custom_call.1} parent=1 // pred_check_branch
      %856 = sbr.rel (0) target = $region49
    $region48: #{tpu_custom_call.1} parent=1 // pred_region
      %s858 = ssub.s32 64, 64
      %859 = vsyncadd [#allocation3], %s858
      %s861 = sshll.u32 [#allocation2], 4
      %s862 = int_to_ptr.vmem [resolvable:$true] %s861
      %864 = dma.vmem_to_hbm [thread:$0]  %s862, 64, %s11, [#allocation3]
    $region49: #{tpu_custom_call.1} parent=1 // pred_fallthru
      _
    // Predicated region
    $region50: #{tpu_custom_call.1} parent=1 // pred_check
      _
    $region51: #{tpu_custom_call.1} parent=1 // pred_check_branch
      %866 = sbr.rel (0) target = $region53
    $region52: #{tpu_custom_call.1} parent=1 // pred_region
      %867 = dma.done [#allocation3], 64
    $region53: #{tpu_custom_call.1} parent=1 // pred_fallthru
      _
    %868 = vsyncpa [#allocation3], 1

</llo_original>
